<compile_context>
chip_gen: v7x
topology: tpu7x:2x2x1
jax: 0.10.0
libtpu: 0.0.40
codegen_flags: <defaults>
</compile_context>

<pallas_src>
import jax
import jax.numpy as jnp
import numpy as np
from jax.experimental import pallas as pl
from jax.experimental.pallas import tpu as pltpu

LANE = 128     # vreg lane width    -> feature dims padded to 128
SUBLANE = 8    # vreg sublane width -> node counts padded to 8


def _round_up(x, m):
    return ((x + m - 1) // m) * m


def _make_fused_sage_kernel(n_layers, n_dsts_pad):
    """Fused multi-layer SAGE body.

    Ref order: A_0, invdeg_0, ..., A_{L-1}, invdeg_{L-1}, x,
               (w_self_0, w_neigh_0, b_0), ..., out.
    All refs are whole-array VMEM blocks (sampled-block sizes are tiny).
    """

    def kernel(*refs):
        a_refs = refs[0:2 * n_layers:2]        # bf16 0/1 adjacency [nd_l, ns_l]
        d_refs = refs[1:2 * n_layers:2]        # f32 inverse degree [nd_l, 1]
        x_ref = refs[2 * n_layers]             # bf16 features      [ns_0, Fin_0]
        w_refs = refs[2 * n_layers + 1:-1]     # per layer: w_self, w_neigh, bias
        o_ref = refs[-1]

        h16 = x_ref[...]                       # bf16 MXU operand
        h = None
        for l in range(n_layers):
            w_self = w_refs[3 * l][...]        # bf16 [Fin_l, Fout_l]
            w_neigh = w_refs[3 * l + 1][...]   # bf16 [Fin_l, Fout_l]
            bias = w_refs[3 * l + 2][...]      # f32  [1, Fout_l]

            # 'mean' aggregation: bf16 0/1 adjacency matmul, f32 accumulation;
            # the 1/deg normalization is a separate f32 VPU multiply.
            agg = jnp.dot(a_refs[l][...], h16, preferred_element_type=jnp.float32)
            h_neigh16 = (agg * d_refs[l][...]).astype(jnp.bfloat16)

            # dst nodes are the first n_dst src rows (DGL block convention);
            # n_dst is padded to a multiple of 8 -> zero-cost sublane view.
            h_dst16 = h16[:n_dsts_pad[l], :]

            # Two accumulating MXU dots (no concatenate materialization);
            # bias add / activation in f32 on the VPU.
            h = (jnp.dot(h_dst16, w_self, preferred_element_type=jnp.float32)
                 + jnp.dot(h_neigh16, w_neigh, preferred_element_type=jnp.float32)
                 + bias)
            if l != n_layers - 1:
                h = jnp.maximum(h, 0.0)        # activation (ReLU)
                # dropout: identity in eval mode
            h16 = h.astype(jnp.bfloat16)

        o_ref[...] = h.astype(o_ref.dtype)

    return kernel


def prepare_params(params):
    """Pad each layer's weights to its own lane multiple and cast MXU operands
    to bf16 ONCE (hoisted out of the per-call path). Bias stays f32."""
    prepped = []
    for (w_self, w_neigh, b) in params:
        f_in, f_out = w_self.shape
        fin_p, fout_p = _round_up(f_in, LANE), _round_up(f_out, LANE)
        pad = ((0, fin_p - f_in), (0, fout_p - f_out))
        prepped.append((
            jnp.pad(w_self, pad).astype(jnp.bfloat16),
            jnp.pad(w_neigh, pad).astype(jnp.bfloat16),
            jnp.pad(b.astype(jnp.float32), ((0, 0), (0, fout_p - f_out))),
        ))
    return prepped


def prepare_blocks(blocks01):
    """Per sampled block: keep the raw 0/1 adjacency (exact in bf16) plus a
    separate f32 inverse-degree vector; pad node counts to sublane multiples.
    Padded inverse degrees are 0, so padded rows stay finite (no NaN)."""
    prepped, n_dsts = [], []
    for adj in blocks01:
        n_dst, n_src = adj.shape
        nd_p, ns_p = _round_up(n_dst, SUBLANE), _round_up(n_src, SUBLANE)
        deg = jnp.sum(adj, axis=1, keepdims=True)
        inv_deg = jnp.where(deg > 0, 1.0 / deg, 0.0).astype(jnp.float32)
        prepped.append((
            jnp.pad(adj, ((0, nd_p - n_dst), (0, ns_p - n_src))).astype(jnp.bfloat16),
            jnp.pad(inv_deg, ((0, nd_p - n_dst), (0, 0))),
        ))
        n_dsts.append(int(n_dst))
    return prepped, n_dsts


def sage_forward(x, prep_blocks, prep_params, n_dsts, n_classes):
    """Fused multi-layer SAGE forward on prepared (padded, bf16) operands.

    Returns [n_dst_last, n_classes] in f32.
    """
    n_layers = len(prep_params)
    assert len(prep_blocks) == n_layers

    n_dsts_pad = tuple(int(A.shape[0]) for (A, _) in prep_blocks)
    ns0_pad = int(prep_blocks[0][0].shape[1])
    fin0_pad = int(prep_params[0][0].shape[0])
    fout_last_pad = int(prep_params[-1][0].shape[1])

    # Pad x rows to the padded src count and feats to the lane width; bf16 cast.
    n_src0, f_in0 = x.shape
    x_p = jnp.pad(x.astype(jnp.bfloat16),
                  ((0, ns0_pad - n_src0), (0, fin0_pad - f_in0)))

    operands = []
    for (A_p, d_p) in prep_blocks:
        operands += [A_p, d_p]
    operands.append(x_p)
    for (ws, wn, bp) in prep_params:
        operands += [ws, wn, bp]

    out_shape = jax.ShapeDtypeStruct((n_dsts_pad[-1], fout_last_pad), jnp.float32)

    # Advisory cost estimate + scoped-VMEM request computed from actual sizes.
    flops = 0
    for (A_p, _), (ws, _, _) in zip(prep_blocks, prep_params):
        nd, ns = (int(s) for s in A_p.shape)
        fin_p, fout_p = (int(s) for s in ws.shape)
        flops += 2 * nd * ns * fin_p          # aggregation matmul
        flops += 2 * 2 * nd * fin_p * fout_p  # self + neigh weight matmuls
    bytes_accessed = sum(int(np.prod(o.shape)) * o.dtype.itemsize for o in operands)
    bytes_accessed += int(np.prod(out_shape.shape)) * 4
    vmem_limit = int(min(max(4 * bytes_accessed, 16 << 20), 48 << 20))

    kernel = _make_fused_sage_kernel(n_layers, n_dsts_pad)
    vmem = pl.BlockSpec(memory_space=pltpu.MemorySpace.VMEM)

    out_padded = pl.pallas_call(
        kernel,
        out_shape=out_shape,
        in_specs=[vmem] * len(operands),
        out_specs=vmem,
        compiler_params=pltpu.CompilerParams(vmem_limit_bytes=vmem_limit),
        cost_estimate=pl.CostEstimate(flops=flops, transcendentals=0,
                                      bytes_accessed=bytes_accessed),
    )(*operands)

    return out_padded[:n_dsts[-1], :n_classes]


# ----------------------------- test harness -----------------------------

def _make_block_adjacency(key, n_dst, n_src, p=0.3):
    """Random 0/1 bipartite block adjacency (unnormalized). Destination node i
    is also source node i (DGL block convention); the self edge guarantees
    degree >= 1 on every row."""
    adj = jax.random.bernoulli(key, p, (n_dst, n_src)).astype(jnp.float32)
    adj = adj.at[jnp.arange(n_dst), jnp.arange(n_dst)].set(1.0)
    return adj


def _init_layer_params(key, f_in, f_out):
    k1, k2, k3 = jax.random.split(key, 3)
    scale = 1.0 / np.sqrt(f_in)
    w_self = jax.random.uniform(k1, (f_in, f_out), jnp.float32, -scale, scale)
    w_neigh = jax.random.uniform(k2, (f_in, f_out), jnp.float32, -scale, scale)
    bias = jax.random.uniform(k3, (1, f_out), jnp.float32, -scale, scale)
    return w_self, w_neigh, bias


def _reference_forward(blocks01, x, params):
    """Pure f32 reference of the module semantics (SAGEConv 'mean')."""
    h = x
    n_layers = len(params)
    for l, (adj, (w_self, w_neigh, b)) in enumerate(zip(blocks01, params)):
        deg = jnp.sum(adj, axis=1, keepdims=True)
        h_dst = h[: adj.shape[0]]
        h_neigh = (adj @ h) / deg
        h = h_dst @ w_self + h_neigh @ w_neigh + b
        if l != n_layers - 1:
            h = jnp.maximum(h, 0.0)
    return h


if __name__ == "__main__":
    # SAGE(in_feats=16, n_hidden=32, n_classes=8, n_layers=2, activation=relu, dropout=0.5)
    in_feats, n_hidden, n_classes, n_layers = 16, 32, 8, 2

    # Sampled MFG sizes: 64 src nodes -> 32 dst nodes -> 16 dst nodes.
    node_counts = [64, 32, 16]

    root = jax.random.PRNGKey(0)
    k_x, k_b0, k_b1, k_p0, k_p1 = jax.random.split(root, 5)

    x = jax.random.normal(k_x, (node_counts[0], in_feats), jnp.float32)
    blocks01 = [
        _make_block_adjacency(k_b0, node_counts[1], node_counts[0]),
        _make_block_adjacency(k_b1, node_counts[2], node_counts[1]),
    ]

    feat_sizes = [in_feats, n_hidden, n_classes]
    params = [
        _init_layer_params(k_p0, feat_sizes[0], feat_sizes[1]),
        _init_layer_params(k_p1, feat_sizes[1], feat_sizes[2]),
    ]

    # One-time preparation (padding + bf16 casts hoisted out of the call path).
    prep_params = prepare_params(params)
    prep_blocks, n_dsts = prepare_blocks(blocks01)

    out = sage_forward(x, prep_blocks, prep_params, n_dsts, n_classes)
    out = jax.block_until_ready(out)

    ref = _reference_forward(blocks01, x, params)
    # bf16 MXU operands with f32 accumulation: ~0.5-1% relative error vs f32 ref.
    np.testing.assert_allclose(np.asarray(out), np.asarray(ref), rtol=3e-2, atol=3e-2)

    assert out.shape == (node_counts[-1], n_classes)
    print("KERNEL_OK")
</pallas_src>

<mosaic_0001>
module attributes {stable_mosaic.version = 11 : i64} {
  func.func @kernel(%arg0: memref<32x64xbf16, #tpu.memory_space<vmem>>, %arg1: memref<32x1xf32, #tpu.memory_space<vmem>>, %arg2: memref<16x32xbf16, #tpu.memory_space<vmem>>, %arg3: memref<16x1xf32, #tpu.memory_space<vmem>>, %arg4: memref<64x128xbf16, #tpu.memory_space<vmem>>, %arg5: memref<128x128xbf16, #tpu.memory_space<vmem>>, %arg6: memref<128x128xbf16, #tpu.memory_space<vmem>>, %arg7: memref<1x128xf32, #tpu.memory_space<vmem>>, %arg8: memref<128x128xbf16, #tpu.memory_space<vmem>>, %arg9: memref<128x128xbf16, #tpu.memory_space<vmem>>, %arg10: memref<1x128xf32, #tpu.memory_space<vmem>>, %arg11: memref<16x128xf32, #tpu.memory_space<vmem>>) attributes {dimension_semantics = [], scalar_prefetch = 0 : i64, scratch_operands = 0 : i64, tpu.core_type = #tpu.core_type<tc>} {
    %c0 = arith.constant 0 : index
    %c0_0 = arith.constant 0 : index
    %0 = vector.load %arg4[%c0, %c0_0] : memref<64x128xbf16, #tpu.memory_space<vmem>>, vector<64x128xbf16>
    %c0_1 = arith.constant 0 : index
    %c0_2 = arith.constant 0 : index
    %1 = vector.load %arg5[%c0_1, %c0_2] : memref<128x128xbf16, #tpu.memory_space<vmem>>, vector<128x128xbf16>
    %c0_3 = arith.constant 0 : index
    %c0_4 = arith.constant 0 : index
    %2 = vector.load %arg6[%c0_3, %c0_4] : memref<128x128xbf16, #tpu.memory_space<vmem>>, vector<128x128xbf16>
    %c0_5 = arith.constant 0 : index
    %c0_6 = arith.constant 0 : index
    %3 = vector.load %arg7[%c0_5, %c0_6] : memref<1x128xf32, #tpu.memory_space<vmem>>, vector<1x128xf32>
    %c0_7 = arith.constant 0 : index
    %c0_8 = arith.constant 0 : index
    %4 = vector.load %arg0[%c0_7, %c0_8] : memref<32x64xbf16, #tpu.memory_space<vmem>>, vector<32x64xbf16>
    %cst = arith.constant dense<0.000000e+00> : vector<32x128xf32>
    %5 = tpu.matmul %4, %0, %cst {dimension_numbers = #tpu.dot_dimension_numbers<[1], [0], [0], [1], [0, 0, 1, 1], [], []>} : vector<32x64xbf16>, vector<64x128xbf16>, vector<32x128xf32> -> vector<32x128xf32>
    %c0_9 = arith.constant 0 : index
    %c0_10 = arith.constant 0 : index
    %6 = vector.load %arg1[%c0_9, %c0_10] : memref<32x1xf32, #tpu.memory_space<vmem>>, vector<32x1xf32>
    %7 = vector.broadcast %6 : vector<32x1xf32> to vector<32x128xf32>
    %8 = arith.mulf %5, %7 : vector<32x128xf32>
    %9 = arith.truncf %8 : vector<32x128xf32> to vector<32x128xbf16>
    %10 = vector.extract_strided_slice %0 {offsets = [0, 0], sizes = [32, 128], strides = [1, 1]} : vector<64x128xbf16> to vector<32x128xbf16>
    %cst_11 = arith.constant dense<0.000000e+00> : vector<32x128xf32>
    %11 = tpu.matmul %10, %1, %cst_11 {dimension_numbers = #tpu.dot_dimension_numbers<[1], [0], [0], [1], [0, 0, 1, 1], [], []>} : vector<32x128xbf16>, vector<128x128xbf16>, vector<32x128xf32> -> vector<32x128xf32>
    %cst_12 = arith.constant dense<0.000000e+00> : vector<32x128xf32>
    %12 = tpu.matmul %9, %2, %cst_12 {dimension_numbers = #tpu.dot_dimension_numbers<[1], [0], [0], [1], [0, 0, 1, 1], [], []>} : vector<32x128xbf16>, vector<128x128xbf16>, vector<32x128xf32> -> vector<32x128xf32>
    %13 = arith.addf %11, %12 : vector<32x128xf32>
    %14 = vector.broadcast %3 : vector<1x128xf32> to vector<32x128xf32>
    %15 = arith.addf %13, %14 : vector<32x128xf32>
    %cst_13 = arith.constant 0.000000e+00 : f32
    %16 = vector.broadcast %cst_13 : f32 to vector<32x128xf32>
    %17 = arith.maximumf %15, %16 : vector<32x128xf32>
    %18 = arith.truncf %17 : vector<32x128xf32> to vector<32x128xbf16>
    %c0_14 = arith.constant 0 : index
    %c0_15 = arith.constant 0 : index
    %19 = vector.load %arg8[%c0_14, %c0_15] : memref<128x128xbf16, #tpu.memory_space<vmem>>, vector<128x128xbf16>
    %c0_16 = arith.constant 0 : index
    %c0_17 = arith.constant 0 : index
    %20 = vector.load %arg9[%c0_16, %c0_17] : memref<128x128xbf16, #tpu.memory_space<vmem>>, vector<128x128xbf16>
    %c0_18 = arith.constant 0 : index
    %c0_19 = arith.constant 0 : index
    %21 = vector.load %arg10[%c0_18, %c0_19] : memref<1x128xf32, #tpu.memory_space<vmem>>, vector<1x128xf32>
    %c0_20 = arith.constant 0 : index
    %c0_21 = arith.constant 0 : index
    %22 = vector.load %arg2[%c0_20, %c0_21] : memref<16x32xbf16, #tpu.memory_space<vmem>>, vector<16x32xbf16>
    %cst_22 = arith.constant dense<0.000000e+00> : vector<16x128xf32>
    %23 = tpu.matmul %22, %18, %cst_22 {dimension_numbers = #tpu.dot_dimension_numbers<[1], [0], [0], [1], [0, 0, 1, 1], [], []>} : vector<16x32xbf16>, vector<32x128xbf16>, vector<16x128xf32> -> vector<16x128xf32>
    %c0_23 = arith.constant 0 : index
    %c0_24 = arith.constant 0 : index
    %24 = vector.load %arg3[%c0_23, %c0_24] : memref<16x1xf32, #tpu.memory_space<vmem>>, vector<16x1xf32>
    %25 = vector.broadcast %24 : vector<16x1xf32> to vector<16x128xf32>
    %26 = arith.mulf %23, %25 : vector<16x128xf32>
    %27 = arith.truncf %26 : vector<16x128xf32> to vector<16x128xbf16>
    %28 = vector.extract_strided_slice %18 {offsets = [0, 0], sizes = [16, 128], strides = [1, 1]} : vector<32x128xbf16> to vector<16x128xbf16>
    %cst_25 = arith.constant dense<0.000000e+00> : vector<16x128xf32>
    %29 = tpu.matmul %28, %19, %cst_25 {dimension_numbers = #tpu.dot_dimension_numbers<[1], [0], [0], [1], [0, 0, 1, 1], [], []>} : vector<16x128xbf16>, vector<128x128xbf16>, vector<16x128xf32> -> vector<16x128xf32>
    %cst_26 = arith.constant dense<0.000000e+00> : vector<16x128xf32>
    %30 = tpu.matmul %27, %20, %cst_26 {dimension_numbers = #tpu.dot_dimension_numbers<[1], [0], [0], [1], [0, 0, 1, 1], [], []>} : vector<16x128xbf16>, vector<128x128xbf16>, vector<16x128xf32> -> vector<16x128xf32>
    %31 = arith.addf %29, %30 : vector<16x128xf32>
    %32 = vector.broadcast %21 : vector<1x128xf32> to vector<16x128xf32>
    %33 = arith.addf %31, %32 : vector<16x128xf32>
    %c0_27 = arith.constant 0 : index
    %c0_28 = arith.constant 0 : index
    %34 = vector.load %arg11[%c0_27, %c0_28] : memref<16x128xf32, #tpu.memory_space<vmem>>, vector<16x128xf32>
    tpu.vector_store %arg11[%c0_27, %c0_28], %33 {strides = array<i32>} : memref<16x128xf32, #tpu.memory_space<vmem>>, vector<16x128xf32>,
    return
  }
}

</mosaic_0001>

<llo_original>
// kernel: tpu_custom_call.1
$region0: #{tpu_custom_call.1}
  #allocation0 [shape = 'u32[]', space=smem, size = 0x4, offset = 0x4, fixed_abs, tag = 'smem constant byte address 0x4 - core index']
  #allocation1 [shape = 'u32[144,128]{1,0:T(1,128)}', space=vmem, size = 0x12000, scoped, tag = 'internal scratch']
  %s0 = inlined_call_operand.hbm [shape: bf16[32,64], index: 0, kind: input, shape index: {}]
  %s1 = inlined_call_operand.vmem [shape: f32[32,1], index: 1, kind: input, shape index: {}]
  %s2 = inlined_call_operand.hbm [shape: bf16[16,32], index: 2, kind: input, shape index: {}]
  %s3 = inlined_call_operand.vmem [shape: f32[16,1], index: 3, kind: input, shape index: {}]
  %s4 = inlined_call_operand.hbm [shape: bf16[64,128], index: 4, kind: input, shape index: {}]
  %s5 = inlined_call_operand.vmem [shape: bf16[128,128], index: 5, kind: input, shape index: {}]
  %s6 = inlined_call_operand.hbm [shape: bf16[128,128], index: 6, kind: input, shape index: {}]
  %s7 = inlined_call_operand.vmem [shape: f32[1,128], index: 7, kind: input, shape index: {}]
  %s8 = inlined_call_operand.hbm [shape: bf16[128,128], index: 8, kind: input, shape index: {}]
  %s9 = inlined_call_operand.hbm [shape: bf16[128,128], index: 9, kind: input, shape index: {}]
  %s10 = inlined_call_operand.vmem [shape: f32[1,128], index: 10, kind: input, shape index: {}]
  %s11 = inlined_call_operand.hbm [shape: f32[16,128], index: 11, kind: output, shape index: {}]
  %s12 = sld [smem:[#allocation0]]
  $region78: #{tpu_custom_call.1} parent=0
    _
  %s14 = ssub.s32 1, %s12
  %s15 = scalar_select 0, %s14, %s12
  $region1: #{tpu_custom_call.1} parent=0
    #allocation2 [shape = 'u8[8192]{0}', space=vmem, size = 0x2000, scoped, tag = 'input window, operand 0, single buffered']
    #allocation3 [shape = 's32[1]{0}', space=sflag, size = 0x4, scoped, tag = 'scoped memory for tpu_custom_call.1']
    #allocation4 [shape = 's32[1]{0}', space=sflag, size = 0x4, scoped, tag = 'scoped memory for tpu_custom_call.1']
    #allocation5 [shape = 'u8[4096]{0}', space=vmem, size = 0x1000, scoped, tag = 'input window, operand 2, single buffered']
    #allocation6 [shape = 's32[1]{0}', space=sflag, size = 0x4, scoped, tag = 'scoped memory for tpu_custom_call.1']
    #allocation7 [shape = 'u8[16384]{0}', space=vmem, size = 0x4000, scoped, tag = 'input window, operand 4, single buffered']
    #allocation8 [shape = 'u8[32768]{0}', space=vmem, size = 0x8000, scoped, tag = 'input window, operand 6, single buffered']
    #allocation9 [shape = 's32[1]{0}', space=sflag, size = 0x4, scoped, tag = 'scoped memory for tpu_custom_call.1']
    #allocation10 [shape = 'u8[32768]{0}', space=vmem, size = 0x8000, scoped, tag = 'input window, operand 8, single buffered']
    #allocation11 [shape = 'u8[32768]{0}', space=vmem, size = 0x8000, scoped, tag = 'input window, operand 9, single buffered']
    #allocation12 [shape = 's32[1]{0}', space=sflag, size = 0x4, scoped, tag = 'scoped memory for tpu_custom_call.1']
    #allocation13 [shape = 'u8[8192]{0}', space=vmem, size = 0x2000, scoped, tag = 'output window, operand 0, single buffered']
    %16 = vsyncpa [#allocation3], 0
    %17 = vsyncpa [#allocation6], 0
    %18 = vsyncpa [#allocation9], 0
    %19 = vsyncpa [#allocation12], 0
    %20 = vsyncpa [#allocation4], 0
    // Predicated region
    $region2: #{tpu_custom_call.1} parent=1 // pred_check
      _
    $region3: #{tpu_custom_call.1} parent=1 // pred_check_branch
      %22 = sbr.rel (0) target = $region5
    $region4: #{tpu_custom_call.1} parent=1 // pred_region
      %s24 = ssub.s32 256, 256
      %25 = vsyncadd [#allocation3], %s24
      %s26 = sshll.u32 [#allocation2], 4
      %s27 = int_to_ptr.vmem [resolvable:$true] %s26
      %32 = dma.hbm_to_vmem [thread:$0]  %s0, 256, %s27, [#allocation3], 64, 64, 4
    $region5: #{tpu_custom_call.1} parent=1 // pred_fallthru
      _
    // Predicated region
    $region6: #{tpu_custom_call.1} parent=1 // pred_check
      _
    $region7: #{tpu_custom_call.1} parent=1 // pred_check_branch
      %34 = sbr.rel (0) target = $region9
    $region8: #{tpu_custom_call.1} parent=1 // pred_region
      _
    $region9: #{tpu_custom_call.1} parent=1 // pred_fallthru
      _
    // Predicated region
    $region10: #{tpu_custom_call.1} parent=1 // pred_check
      _
    $region11: #{tpu_custom_call.1} parent=1 // pred_check_branch
      %36 = sbr.rel (0) target = $region13
    $region12: #{tpu_custom_call.1} parent=1 // pred_region
      %s38 = ssub.s32 128, 128
      %39 = vsyncadd [#allocation6], %s38
      %s40 = sshll.u32 [#allocation5], 4
      %s41 = int_to_ptr.vmem [resolvable:$true] %s40
      %46 = dma.hbm_to_vmem [thread:$0]  %s2, 128, %s41, [#allocation6], 64, 64, 4
    $region13: #{tpu_custom_call.1} parent=1 // pred_fallthru
      _
    // Predicated region
    $region14: #{tpu_custom_call.1} parent=1 // pred_check
      _
    $region15: #{tpu_custom_call.1} parent=1 // pred_check_branch
      %48 = sbr.rel (0) target = $region17
    $region16: #{tpu_custom_call.1} parent=1 // pred_region
      _
    $region17: #{tpu_custom_call.1} parent=1 // pred_fallthru
      _
    // Predicated region
    $region18: #{tpu_custom_call.1} parent=1 // pred_check
      _
    $region19: #{tpu_custom_call.1} parent=1 // pred_check_branch
      %50 = sbr.rel (0) target = $region21
    $region20: #{tpu_custom_call.1} parent=1 // pred_region
      %s52 = ssub.s32 512, 512
      %53 = vsyncadd [#allocation6], %s52
      %s54 = sshll.u32 [#allocation7], 4
      %s55 = int_to_ptr.vmem [resolvable:$true] %s54
      %60 = dma.hbm_to_vmem [thread:$0]  %s4, 512, %s55, [#allocation6], 64, 64, 4
    $region21: #{tpu_custom_call.1} parent=1 // pred_fallthru
      _
    // Predicated region
    $region22: #{tpu_custom_call.1} parent=1 // pred_check
      _
    $region23: #{tpu_custom_call.1} parent=1 // pred_check_branch
      %62 = sbr.rel (0) target = $region25
    $region24: #{tpu_custom_call.1} parent=1 // pred_region
      _
    $region25: #{tpu_custom_call.1} parent=1 // pred_fallthru
      _
    // Predicated region
    $region26: #{tpu_custom_call.1} parent=1 // pred_check
      _
    $region27: #{tpu_custom_call.1} parent=1 // pred_check_branch
      %64 = sbr.rel (0) target = $region29
    $region28: #{tpu_custom_call.1} parent=1 // pred_region
      %s66 = ssub.s32 1024, 1024
      %67 = vsyncadd [#allocation9], %s66
      %s68 = sshll.u32 [#allocation8], 4
      %s69 = int_to_ptr.vmem [resolvable:$true] %s68
      %74 = dma.hbm_to_vmem [thread:$0]  %s6, 1024, %s69, [#allocation9], 64, 64, 4
    $region29: #{tpu_custom_call.1} parent=1 // pred_fallthru
      _
    // Predicated region
    $region30: #{tpu_custom_call.1} parent=1 // pred_check
      _
    $region31: #{tpu_custom_call.1} parent=1 // pred_check_branch
      %76 = sbr.rel (0) target = $region33
    $region32: #{tpu_custom_call.1} parent=1 // pred_region
      _
    $region33: #{tpu_custom_call.1} parent=1 // pred_fallthru
      _
    // Predicated region
    $region34: #{tpu_custom_call.1} parent=1 // pred_check
      _
    $region35: #{tpu_custom_call.1} parent=1 // pred_check_branch
      %78 = sbr.rel (0) target = $region37
    $region36: #{tpu_custom_call.1} parent=1 // pred_region
      %s80 = ssub.s32 1024, 1024
      %81 = vsyncadd [#allocation9], %s80
      %s82 = sshll.u32 [#allocation10], 4
      %s83 = int_to_ptr.vmem [resolvable:$true] %s82
      %88 = dma.hbm_to_vmem [thread:$0]  %s8, 1024, %s83, [#allocation9], 64, 64, 4
    $region37: #{tpu_custom_call.1} parent=1 // pred_fallthru
      _
    // Predicated region
    $region38: #{tpu_custom_call.1} parent=1 // pred_check
      _
    $region39: #{tpu_custom_call.1} parent=1 // pred_check_branch
      %90 = sbr.rel (0) target = $region41
    $region40: #{tpu_custom_call.1} parent=1 // pred_region
      %s92 = ssub.s32 1024, 1024
      %93 = vsyncadd [#allocation12], %s92
      %s94 = sshll.u32 [#allocation11], 4
      %s95 = int_to_ptr.vmem [resolvable:$true] %s94
      %100 = dma.hbm_to_vmem [thread:$0]  %s9, 1024, %s95, [#allocation12], 64, 64, 4
    $region41: #{tpu_custom_call.1} parent=1 // pred_fallthru
      _
    // Predicated region
    $region42: #{tpu_custom_call.1} parent=1 // pred_check
      _
    $region43: #{tpu_custom_call.1} parent=1 // pred_check_branch
      %102 = sbr.rel (0) target = $region45
    $region44: #{tpu_custom_call.1} parent=1 // pred_region
      _
    $region45: #{tpu_custom_call.1} parent=1 // pred_fallthru
      _
    // Predicated region
    $region46: #{tpu_custom_call.1} parent=1 // pred_check
      _
    $region47: #{tpu_custom_call.1} parent=1 // pred_check_branch
      %104 = sbr.rel (0) target = $region49
    $region48: #{tpu_custom_call.1} parent=1 // pred_region
      %105 = dma.done [#allocation3], 256
    $region49: #{tpu_custom_call.1} parent=1 // pred_fallthru
      _
    // Predicated region
    $region50: #{tpu_custom_call.1} parent=1 // pred_check
      _
    $region51: #{tpu_custom_call.1} parent=1 // pred_check_branch
      %107 = sbr.rel (0) target = $region53
    $region52: #{tpu_custom_call.1} parent=1 // pred_region
      %108 = dma.done [#allocation6], 128
    $region53: #{tpu_custom_call.1} parent=1 // pred_fallthru
      _
    // Predicated region
    $region54: #{tpu_custom_call.1} parent=1 // pred_check
      _
    $region55: #{tpu_custom_call.1} parent=1 // pred_check_branch
      %110 = sbr.rel (0) target = $region57
    $region56: #{tpu_custom_call.1} parent=1 // pred_region
      %111 = dma.done [#allocation6], 512
    $region57: #{tpu_custom_call.1} parent=1 // pred_fallthru
      _
    // Predicated region
    $region58: #{tpu_custom_call.1} parent=1 // pred_check
      _
    $region59: #{tpu_custom_call.1} parent=1 // pred_check_branch
      %113 = sbr.rel (0) target = $region61
    $region60: #{tpu_custom_call.1} parent=1 // pred_region
      %114 = dma.done [#allocation9], 1024
    $region61: #{tpu_custom_call.1} parent=1 // pred_fallthru
      _
    // Predicated region
    $region62: #{tpu_custom_call.1} parent=1 // pred_check
      _
    $region63: #{tpu_custom_call.1} parent=1 // pred_check_branch
      %116 = sbr.rel (0) target = $region65
    $region64: #{tpu_custom_call.1} parent=1 // pred_region
      %117 = dma.done [#allocation9], 1024
    $region65: #{tpu_custom_call.1} parent=1 // pred_fallthru
      _
    // Predicated region
    $region66: #{tpu_custom_call.1} parent=1 // pred_check
      _
    $region67: #{tpu_custom_call.1} parent=1 // pred_check_branch
      %119 = sbr.rel (0) target = $region69
    $region68: #{tpu_custom_call.1} parent=1 // pred_region
      %120 = dma.done [#allocation12], 1024
    $region69: #{tpu_custom_call.1} parent=1 // pred_fallthru
      _
    %v122 = vld [vmem:[#allocation7] sm:$0xf]
    %v123 = vld [vmem:[#allocation7 + $0x4] sm:$0xf]
    %v124 = vld [vmem:[#allocation7 + $0x8] sm:$0xf]
    %v125 = vld [vmem:[#allocation7 + $0xc] sm:$0xf]
    %v126 = vld [vmem:[#allocation7 + $0x10] sm:$0xf]
    %v127 = vld [vmem:[#allocation7 + $0x14] sm:$0xf]
    %v128 = vld [vmem:[#allocation7 + $0x18] sm:$0xf]
    %v129 = vld [vmem:[#allocation7 + $0x1c] sm:$0xf]
    %v130 = vld [vmem:[%s5] sm:$0xf]
    %v131 = vld [vmem:[%s5 + $0x4] sm:$0xf]
    %v132 = vld [vmem:[%s5 + $0x8] sm:$0xf]
    %v133 = vld [vmem:[%s5 + $0xc] sm:$0xf]
    %v134 = vld [vmem:[%s5 + $0x10] sm:$0xf]
    %v135 = vld [vmem:[%s5 + $0x14] sm:$0xf]
    %v136 = vld [vmem:[%s5 + $0x18] sm:$0xf]
    %v137 = vld [vmem:[%s5 + $0x1c] sm:$0xf]
    %v138 = vld [vmem:[%s5 + $0x20] sm:$0xf]
    %v139 = vld [vmem:[%s5 + $0x24] sm:$0xf]
    %v140 = vld [vmem:[%s5 + $0x28] sm:$0xf]
    %v141 = vld [vmem:[%s5 + $0x2c] sm:$0xf]
    %v142 = vld [vmem:[%s5 + $0x30] sm:$0xf]
    %v143 = vld [vmem:[%s5 + $0x34] sm:$0xf]
    %v144 = vld [vmem:[%s5 + $0x38] sm:$0xf]
    %v145 = vld [vmem:[%s5 + $0x3c] sm:$0xf]
    %v146 = vld [vmem:[#allocation8] sm:$0xf]
    %v147 = vld [vmem:[#allocation8 + $0x4] sm:$0xf]
    %v148 = vld [vmem:[#allocation8 + $0x8] sm:$0xf]
    %v149 = vld [vmem:[#allocation8 + $0xc] sm:$0xf]
    %v150 = vld [vmem:[#allocation8 + $0x10] sm:$0xf]
    %v151 = vld [vmem:[#allocation8 + $0x14] sm:$0xf]
    %v152 = vld [vmem:[#allocation8 + $0x18] sm:$0xf]
    %v153 = vld [vmem:[#allocation8 + $0x1c] sm:$0xf]
    %v154 = vld [vmem:[#allocation8 + $0x20] sm:$0xf]
    %v155 = vld [vmem:[#allocation8 + $0x24] sm:$0xf]
    %v156 = vld [vmem:[#allocation8 + $0x28] sm:$0xf]
    %v157 = vld [vmem:[#allocation8 + $0x2c] sm:$0xf]
    %v158 = vld [vmem:[#allocation8 + $0x30] sm:$0xf]
    %v159 = vld [vmem:[#allocation8 + $0x34] sm:$0xf]
    %v160 = vld [vmem:[#allocation8 + $0x38] sm:$0xf]
    %v161 = vld [vmem:[#allocation8 + $0x3c] sm:$0xf]
    %v162 = vld [vmem:[%s7] sm:$0x1]
    %v163 = vld [vmem:[#allocation2] sm:$0xf]
    %v164 = vld [vmem:[#allocation2 + $0x4] sm:$0xf]
    %v165 = vld [vmem:[#allocation2 + $0x8] sm:$0xf]
    %v166 = vld [vmem:[#allocation2 + $0xc] sm:$0xf]
    %v171 = vunpack.c.l.b16 %v163
    %v172 = vunpack.c.l.b16 %v164
    %v173 = vunpack.c.l.b16 %v165
    %v174 = vunpack.c.l.b16 %v166
    %v175 = vpack.c.b16 %v172, %v171
    %v176 = vpack.c.b16 %v174, %v173
    %v185 = vunpack.c.l.b16 %v122
    %v186 = vunpack.c.l.b16 %v123
    %v187 = vunpack.c.l.b16 %v124
    %v188 = vunpack.c.l.b16 %v125
    %v189 = vunpack.c.l.b16 %v126
    %v190 = vunpack.c.l.b16 %v127
    %v191 = vunpack.c.l.b16 %v128
    %v192 = vunpack.c.l.b16 %v129
    %v193 = vpack.c.b16 %v186, %v185
    %v194 = vpack.c.b16 %v188, %v187
    %v195 = vpack.c.b16 %v190, %v189
    %v196 = vpack.c.b16 %v192, %v191
    %vm201 = vcmask 523264
    %v203 = vsel %vm201, %v175, 0
    %v206 = vsel %vm201, %v176, 0
    %208 = vmatprep.subr.bf16.mxu0 0
    %209 = vmatpush1.bf16.msra.mxu0 %v193
    %210 = vmatprep.subr.bf16.mxu0 0
    %211 = vmatpush1.bf16.msra.mxu0 %v194
    %212 = vmatprep.subr.bf16.mxu0 0
    %213 = vmatpush1.bf16.msra.mxu0 %v195
    %214 = vmatprep.subr.bf16.mxu0 0
    %215 = vmatpush1.bf16.msra.mxu0 %v196
    %216 = vmatprep.subr.bf16.mxu0 0
    %217 = vmatpush1.bf16.msra.mxu0 0
    %218 = vmatprep.subr.bf16.mxu0 0
    %219 = vmatpush1.bf16.msra.mxu0 0
    %220 = vmatprep.subr.bf16.mxu0 0
    %221 = vmatpush1.bf16.msra.mxu0 0
    %222 = vmatprep.subr.bf16.mxu0 0
    %223 = vmatpush1.bf16.msra.mxu0 0
    %224 = vmatprep.subr.bf16.mxu0 0
    %225 = vmatpush1.bf16.msra.mxu0 0
    %226 = vmatprep.subr.bf16.mxu0 0
    %227 = vmatpush1.bf16.msra.mxu0 0
    %228 = vmatprep.subr.bf16.mxu0 0
    %229 = vmatpush1.bf16.msra.mxu0 0
    %230 = vmatprep.subr.bf16.mxu0 0
    %231 = vmatpush1.bf16.msra.mxu0 0
    %232 = vmatprep.subr.bf16.mxu0 0
    %233 = vmatpush1.bf16.msra.mxu0 0
    %234 = vmatprep.subr.bf16.mxu0 0
    %235 = vmatpush1.bf16.msra.mxu0 0
    %236 = vmatprep.subr.bf16.mxu0 0
    %237 = vmatpush1.bf16.msra.mxu0 0
    %238 = vmatprep.subr.bf16.mxu0 0
    %239 = vmatpush1.bf16.msra.mxu0 0
    %240 = vmatprep.mubr.bf16.mxu0 0
    %241 = vmatmul.mubr.bf16.gmra.mrb[0].mxu0 %v203
    %v242 = vpop.f32.mrb[0].mxu0
    %v243 = vadd.f32 0.0, %v242
    %v244 = vpop.f32.mrb[0].mxu0
    %v245 = vpop.f32.mrb[0].mxu0
    %v246 = vadd.f32 0.0, %v245
    %v247 = vpop.f32.mrb[0].mxu0
    %248 = vmatprep.mubr.bf16.mxu0 0
    %249 = vmatmul.mubr.bf16.gmra.mrb[0].mxu0 %v206
    %v250 = vpop.f32.mrb[0].mxu0
    %v251 = vadd.f32 0.0, %v250
    %v252 = vpop.f32.mrb[0].mxu0
    %v253 = vpop.f32.mrb[0].mxu0
    %v254 = vadd.f32 0.0, %v253
    %v255 = vpop.f32.mrb[0].mxu0
    %256 = vdwg.mxu0
    %v257 = vld [vmem:[%s1] sm:$0xff]
    %v258 = vld [vmem:[%s1 + $0x8] sm:$0xff]
    %v259 = vld [vmem:[%s1 + $0x10] sm:$0xff]
    %v260 = vld [vmem:[%s1 + $0x18] sm:$0xff]
    %262 = vset.pattern.permute.xlu0 0
    %263 = vperm.xlu0 %262, %v257
    %v264 = vpop.permute.xlu0 %263
    %267 = vset.pattern.permute.xlu0 0
    %268 = vperm.xlu0 %267, %v258
    %v269 = vpop.permute.xlu0 %268
    %272 = vset.pattern.permute.xlu0 0
    %273 = vperm.xlu0 %272, %v259
    %v274 = vpop.permute.xlu0 %273
    %277 = vset.pattern.permute.xlu0 0
    %278 = vperm.xlu0 %277, %v260
    %v279 = vpop.permute.xlu0 %278
    %v281 = vmul.f32 %v243, %v264
    %v282 = vmul.f32 %v246, %v269
    %v283 = vmul.f32 %v251, %v274
    %v284 = vmul.f32 %v254, %v279
    %v285 = vpack.c.bf16 %v282, %v281
    %v286 = vpack.c.bf16 %v284, %v283
    %v303 = vunpack.c.l.b16 %v146
    %v304 = vunpack.c.l.b16 %v147
    %v305 = vunpack.c.l.b16 %v148
    %v306 = vunpack.c.l.b16 %v149
    %v307 = vunpack.c.l.b16 %v150
    %v308 = vunpack.c.l.b16 %v151
    %v309 = vunpack.c.l.b16 %v152
    %v310 = vunpack.c.l.b16 %v153
    %v311 = vunpack.c.l.b16 %v154
    %v312 = vunpack.c.l.b16 %v155
    %v313 = vunpack.c.l.b16 %v156
    %v314 = vunpack.c.l.b16 %v157
    %v315 = vunpack.c.l.b16 %v158
    %v316 = vunpack.c.l.b16 %v159
    %v317 = vunpack.c.l.b16 %v160
    %v318 = vunpack.c.l.b16 %v161
    %v319 = vpack.c.b16 %v304, %v303
    %v320 = vpack.c.b16 %v306, %v305
    %v321 = vpack.c.b16 %v308, %v307
    %v322 = vpack.c.b16 %v310, %v309
    %v323 = vpack.c.b16 %v312, %v311
    %v324 = vpack.c.b16 %v314, %v313
    %v325 = vpack.c.b16 %v316, %v315
    %v326 = vpack.c.b16 %v318, %v317
    %335 = vmatprep.subr.bf16.mxu0 0
    %336 = vmatpush1.bf16.msra.mxu0 %v319
    %337 = vmatprep.subr.bf16.mxu0 0
    %338 = vmatpush1.bf16.msra.mxu0 %v320
    %339 = vmatprep.subr.bf16.mxu0 0
    %340 = vmatpush1.bf16.msra.mxu0 %v321
    %341 = vmatprep.subr.bf16.mxu0 0
    %342 = vmatpush1.bf16.msra.mxu0 %v322
    %343 = vmatprep.subr.bf16.mxu0 0
    %344 = vmatpush1.bf16.msra.mxu0 %v323
    %345 = vmatprep.subr.bf16.mxu0 0
    %346 = vmatpush1.bf16.msra.mxu0 %v324
    %347 = vmatprep.subr.bf16.mxu0 0
    %348 = vmatpush1.bf16.msra.mxu0 %v325
    %349 = vmatprep.subr.bf16.mxu0 0
    %350 = vmatpush1.bf16.msra.mxu0 %v326
    %351 = vmatprep.subr.bf16.mxu0 0
    %352 = vmatpush1.bf16.msra.mxu0 0
    %353 = vmatprep.subr.bf16.mxu0 0
    %354 = vmatpush1.bf16.msra.mxu0 0
    %355 = vmatprep.subr.bf16.mxu0 0
    %356 = vmatpush1.bf16.msra.mxu0 0
    %357 = vmatprep.subr.bf16.mxu0 0
    %358 = vmatpush1.bf16.msra.mxu0 0
    %359 = vmatprep.subr.bf16.mxu0 0
    %360 = vmatpush1.bf16.msra.mxu0 0
    %361 = vmatprep.subr.bf16.mxu0 0
    %362 = vmatpush1.bf16.msra.mxu0 0
    %363 = vmatprep.subr.bf16.mxu0 0
    %364 = vmatpush1.bf16.msra.mxu0 0
    %365 = vmatprep.subr.bf16.mxu0 0
    %366 = vmatpush1.bf16.msra.mxu0 0
    %367 = vmatprep.mubr.bf16.mxu0 0
    %368 = vmatmul.mubr.bf16.gmra.mrb[0].mxu0 %v285
    %v369 = vpop.f32.mrb[0].mxu0
    %v370 = vadd.f32 0.0, %v369
    %v371 = vpop.f32.mrb[0].mxu0
    %v372 = vpop.f32.mrb[0].mxu0
    %v373 = vadd.f32 0.0, %v372
    %v374 = vpop.f32.mrb[0].mxu0
    %375 = vmatprep.mubr.bf16.mxu0 0
    %376 = vmatmul.mubr.bf16.gmra.mrb[0].mxu0 %v286
    %v377 = vpop.f32.mrb[0].mxu0
    %v378 = vadd.f32 0.0, %v377
    %v379 = vpop.f32.mrb[0].mxu0
    %v380 = vpop.f32.mrb[0].mxu0
    %v381 = vadd.f32 0.0, %v380
    %v382 = vpop.f32.mrb[0].mxu0
    %383 = vdwg.mxu0
    %v400 = vunpack.c.l.b16 %v130
    %v401 = vunpack.c.l.b16 %v131
    %v402 = vunpack.c.l.b16 %v132
    %v403 = vunpack.c.l.b16 %v133
    %v404 = vunpack.c.l.b16 %v134
    %v405 = vunpack.c.l.b16 %v135
    %v406 = vunpack.c.l.b16 %v136
    %v407 = vunpack.c.l.b16 %v137
    %v408 = vunpack.c.l.b16 %v138
    %v409 = vunpack.c.l.b16 %v139
    %v410 = vunpack.c.l.b16 %v140
    %v411 = vunpack.c.l.b16 %v141
    %v412 = vunpack.c.l.b16 %v142
    %v413 = vunpack.c.l.b16 %v143
    %v414 = vunpack.c.l.b16 %v144
    %v415 = vunpack.c.l.b16 %v145
    %v416 = vpack.c.b16 %v401, %v400
    %v417 = vpack.c.b16 %v403, %v402
    %v418 = vpack.c.b16 %v405, %v404
    %v419 = vpack.c.b16 %v407, %v406
    %v420 = vpack.c.b16 %v409, %v408
    %v421 = vpack.c.b16 %v411, %v410
    %v422 = vpack.c.b16 %v413, %v412
    %v423 = vpack.c.b16 %v415, %v414
    %432 = vmatprep.subr.bf16.mxu0 0
    %433 = vmatpush1.bf16.msra.mxu0 %v416
    %434 = vmatprep.subr.bf16.mxu0 0
    %435 = vmatpush1.bf16.msra.mxu0 %v417
    %436 = vmatprep.subr.bf16.mxu0 0
    %437 = vmatpush1.bf16.msra.mxu0 %v418
    %438 = vmatprep.subr.bf16.mxu0 0
    %439 = vmatpush1.bf16.msra.mxu0 %v419
    %440 = vmatprep.subr.bf16.mxu0 0
    %441 = vmatpush1.bf16.msra.mxu0 %v420
    %442 = vmatprep.subr.bf16.mxu0 0
    %443 = vmatpush1.bf16.msra.mxu0 %v421
    %444 = vmatprep.subr.bf16.mxu0 0
    %445 = vmatpush1.bf16.msra.mxu0 %v422
    %446 = vmatprep.subr.bf16.mxu0 0
    %447 = vmatpush1.bf16.msra.mxu0 %v423
    %448 = vmatprep.subr.bf16.mxu0 0
    %449 = vmatpush1.bf16.msra.mxu0 0
    %450 = vmatprep.subr.bf16.mxu0 0
    %451 = vmatpush1.bf16.msra.mxu0 0
    %452 = vmatprep.subr.bf16.mxu0 0
    %453 = vmatpush1.bf16.msra.mxu0 0
    %454 = vmatprep.subr.bf16.mxu0 0
    %455 = vmatpush1.bf16.msra.mxu0 0
    %456 = vmatprep.subr.bf16.mxu0 0
    %457 = vmatpush1.bf16.msra.mxu0 0
    %458 = vmatprep.subr.bf16.mxu0 0
    %459 = vmatpush1.bf16.msra.mxu0 0
    %460 = vmatprep.subr.bf16.mxu0 0
    %461 = vmatpush1.bf16.msra.mxu0 0
    %462 = vmatprep.subr.bf16.mxu0 0
    %463 = vmatpush1.bf16.msra.mxu0 0
    %464 = vmatprep.mubr.bf16.mxu0 0
    %465 = vmatmul.mubr.bf16.gmra.mrb[0].mxu0 %v193
    %v466 = vpop.f32.mrb[0].mxu0
    %v467 = vadd.f32 %v370, %v466
    %v468 = vpop.f32.mrb[0].mxu0
    %v469 = vpop.f32.mrb[0].mxu0
    %v470 = vadd.f32 %v373, %v469
    %v471 = vpop.f32.mrb[0].mxu0
    %472 = vmatprep.mubr.bf16.mxu0 0
    %473 = vmatmul.mubr.bf16.gmra.mrb[0].mxu0 %v194
    %v474 = vpop.f32.mrb[0].mxu0
    %v475 = vadd.f32 %v378, %v474
    %v476 = vpop.f32.mrb[0].mxu0
    %v477 = vpop.f32.mrb[0].mxu0
    %v478 = vadd.f32 %v381, %v477
    %v479 = vpop.f32.mrb[0].mxu0
    %480 = vdwg.mxu0
    %v482 = vlaneseq
    %v483 = vshrl.u32 %v482, 7
    %v484 = vsub.s32 0, %v483
    %v485 = vrot.slane %v162, %v484
    %v487 = vadd.f32 %v467, %v485
    %v488 = vadd.f32 %v470, %v485
    %v489 = vadd.f32 %v475, %v485
    %v490 = vadd.f32 %v478, %v485
    %v491 = vmax.f32 %v487, 0.0
    %v492 = vmax.f32 %v488, 0.0
    %v493 = vmax.f32 %v489, 0.0
    %v494 = vmax.f32 %v490, 0.0
    %v495 = vpack.c.bf16 %v492, %v491
    %v496 = vpack.c.bf16 %v494, %v493
    %v497 = vld [vmem:[#allocation10] sm:$0xf]
    %v498 = vld [vmem:[#allocation10 + $0x4] sm:$0xf]
    %v499 = vld [vmem:[#allocation10 + $0x8] sm:$0xf]
    %v500 = vld [vmem:[#allocation10 + $0xc] sm:$0xf]
    %v501 = vld [vmem:[#allocation10 + $0x10] sm:$0xf]
    %v502 = vld [vmem:[#allocation10 + $0x14] sm:$0xf]
    %v503 = vld [vmem:[#allocation10 + $0x18] sm:$0xf]
    %v504 = vld [vmem:[#allocation10 + $0x1c] sm:$0xf]
    %v505 = vld [vmem:[#allocation10 + $0x20] sm:$0xf]
    %v506 = vld [vmem:[#allocation10 + $0x24] sm:$0xf]
    %v507 = vld [vmem:[#allocation10 + $0x28] sm:$0xf]
    %v508 = vld [vmem:[#allocation10 + $0x2c] sm:$0xf]
    %v509 = vld [vmem:[#allocation10 + $0x30] sm:$0xf]
    %v510 = vld [vmem:[#allocation10 + $0x34] sm:$0xf]
    %v511 = vld [vmem:[#allocation10 + $0x38] sm:$0xf]
    %v512 = vld [vmem:[#allocation10 + $0x3c] sm:$0xf]
    %v513 = vld [vmem:[#allocation11] sm:$0xf]
    %v514 = vld [vmem:[#allocation11 + $0x4] sm:$0xf]
    %v515 = vld [vmem:[#allocation11 + $0x8] sm:$0xf]
    %v516 = vld [vmem:[#allocation11 + $0xc] sm:$0xf]
    %v517 = vld [vmem:[#allocation11 + $0x10] sm:$0xf]
    %v518 = vld [vmem:[#allocation11 + $0x14] sm:$0xf]
    %v519 = vld [vmem:[#allocation11 + $0x18] sm:$0xf]
    %v520 = vld [vmem:[#allocation11 + $0x1c] sm:$0xf]
    %v521 = vld [vmem:[#allocation11 + $0x20] sm:$0xf]
    %v522 = vld [vmem:[#allocation11 + $0x24] sm:$0xf]
    %v523 = vld [vmem:[#allocation11 + $0x28] sm:$0xf]
    %v524 = vld [vmem:[#allocation11 + $0x2c] sm:$0xf]
    %v525 = vld [vmem:[#allocation11 + $0x30] sm:$0xf]
    %v526 = vld [vmem:[#allocation11 + $0x34] sm:$0xf]
    %v527 = vld [vmem:[#allocation11 + $0x38] sm:$0xf]
    %v528 = vld [vmem:[#allocation11 + $0x3c] sm:$0xf]
    %v529 = vld [vmem:[%s10] sm:$0x1]
    %v530 = vld [vmem:[#allocation5] sm:$0xf]
    %v531 = vld [vmem:[#allocation5 + $0x4] sm:$0xf]
    %v534 = vunpack.c.l.b16 %v530
    %v535 = vunpack.c.l.b16 %v531
    %v536 = vpack.c.b16 %v535, %v534
    %vm537 = vcmask 261120
    %v539 = vsel %vm537, %v536, 0
    %541 = vmatprep.subr.bf16.mxu0 0
    %542 = vmatpush1.bf16.msra.mxu0 %v495
    %543 = vmatprep.subr.bf16.mxu0 0
    %544 = vmatpush1.bf16.msra.mxu0 %v496
    %545 = vmatprep.subr.bf16.mxu0 0
    %546 = vmatpush1.bf16.msra.mxu0 0
    %547 = vmatprep.subr.bf16.mxu0 0
    %548 = vmatpush1.bf16.msra.mxu0 0
    %549 = vmatprep.subr.bf16.mxu0 0
    %550 = vmatpush1.bf16.msra.mxu0 0
    %551 = vmatprep.subr.bf16.mxu0 0
    %552 = vmatpush1.bf16.msra.mxu0 0
    %553 = vmatprep.subr.bf16.mxu0 0
    %554 = vmatpush1.bf16.msra.mxu0 0
    %555 = vmatprep.subr.bf16.mxu0 0
    %556 = vmatpush1.bf16.msra.mxu0 0
    %557 = vmatprep.subr.bf16.mxu0 0
    %558 = vmatpush1.bf16.msra.mxu0 0
    %559 = vmatprep.subr.bf16.mxu0 0
    %560 = vmatpush1.bf16.msra.mxu0 0
    %561 = vmatprep.subr.bf16.mxu0 0
    %562 = vmatpush1.bf16.msra.mxu0 0
    %563 = vmatprep.subr.bf16.mxu0 0
    %564 = vmatpush1.bf16.msra.mxu0 0
    %565 = vmatprep.subr.bf16.mxu0 0
    %566 = vmatpush1.bf16.msra.mxu0 0
    %567 = vmatprep.subr.bf16.mxu0 0
    %568 = vmatpush1.bf16.msra.mxu0 0
    %569 = vmatprep.subr.bf16.mxu0 0
    %570 = vmatpush1.bf16.msra.mxu0 0
    %571 = vmatprep.subr.bf16.mxu0 0
    %572 = vmatpush1.bf16.msra.mxu0 0
    %573 = vmatprep.mubr.bf16.mxu0 0
    %574 = vmatmul.mubr.bf16.gmra.mrb[0].mxu0 %v539
    %v575 = vpop.f32.mrb[0].mxu0
    %v576 = vadd.f32 0.0, %v575
    %v577 = vpop.f32.mrb[0].mxu0
    %v578 = vpop.f32.mrb[0].mxu0
    %v579 = vadd.f32 0.0, %v578
    %v580 = vpop.f32.mrb[0].mxu0
    %581 = vdwg.mxu0
    %v582 = vld [vmem:[%s3] sm:$0xff]
    %v583 = vld [vmem:[%s3 + $0x8] sm:$0xff]
    %585 = vset.pattern.permute.xlu0 0
    %586 = vperm.xlu0 %585, %v582
    %v587 = vpop.permute.xlu0 %586
    %590 = vset.pattern.permute.xlu0 0
    %591 = vperm.xlu0 %590, %v583
    %v592 = vpop.permute.xlu0 %591
    %v594 = vmul.f32 %v576, %v587
    %v595 = vmul.f32 %v579, %v592
    %v596 = vpack.c.bf16 %v595, %v594
    %v613 = vunpack.c.l.b16 %v513
    %v614 = vunpack.c.l.b16 %v514
    %v615 = vunpack.c.l.b16 %v515
    %v616 = vunpack.c.l.b16 %v516
    %v617 = vunpack.c.l.b16 %v517
    %v618 = vunpack.c.l.b16 %v518
    %v619 = vunpack.c.l.b16 %v519
    %v620 = vunpack.c.l.b16 %v520
    %v621 = vunpack.c.l.b16 %v521
    %v622 = vunpack.c.l.b16 %v522
    %v623 = vunpack.c.l.b16 %v523
    %v624 = vunpack.c.l.b16 %v524
    %v625 = vunpack.c.l.b16 %v525
    %v626 = vunpack.c.l.b16 %v526
    %v627 = vunpack.c.l.b16 %v527
    %v628 = vunpack.c.l.b16 %v528
    %v629 = vpack.c.b16 %v614, %v613
    %v630 = vpack.c.b16 %v616, %v615
    %v631 = vpack.c.b16 %v618, %v617
    %v632 = vpack.c.b16 %v620, %v619
    %v633 = vpack.c.b16 %v622, %v621
    %v634 = vpack.c.b16 %v624, %v623
    %v635 = vpack.c.b16 %v626, %v625
    %v636 = vpack.c.b16 %v628, %v627
    %645 = vmatprep.subr.bf16.mxu0 0
    %646 = vmatpush1.bf16.msra.mxu0 %v629
    %647 = vmatprep.subr.bf16.mxu0 0
    %648 = vmatpush1.bf16.msra.mxu0 %v630
    %649 = vmatprep.subr.bf16.mxu0 0
    %650 = vmatpush1.bf16.msra.mxu0 %v631
    %651 = vmatprep.subr.bf16.mxu0 0
    %652 = vmatpush1.bf16.msra.mxu0 %v632
    %653 = vmatprep.subr.bf16.mxu0 0
    %654 = vmatpush1.bf16.msra.mxu0 %v633
    %655 = vmatprep.subr.bf16.mxu0 0
    %656 = vmatpush1.bf16.msra.mxu0 %v634
    %657 = vmatprep.subr.bf16.mxu0 0
    %658 = vmatpush1.bf16.msra.mxu0 %v635
    %659 = vmatprep.subr.bf16.mxu0 0
    %660 = vmatpush1.bf16.msra.mxu0 %v636
    %661 = vmatprep.subr.bf16.mxu0 0
    %662 = vmatpush1.bf16.msra.mxu0 0
    %663 = vmatprep.subr.bf16.mxu0 0
    %664 = vmatpush1.bf16.msra.mxu0 0
    %665 = vmatprep.subr.bf16.mxu0 0
    %666 = vmatpush1.bf16.msra.mxu0 0
    %667 = vmatprep.subr.bf16.mxu0 0
    %668 = vmatpush1.bf16.msra.mxu0 0
    %669 = vmatprep.subr.bf16.mxu0 0
    %670 = vmatpush1.bf16.msra.mxu0 0
    %671 = vmatprep.subr.bf16.mxu0 0
    %672 = vmatpush1.bf16.msra.mxu0 0
    %673 = vmatprep.subr.bf16.mxu0 0
    %674 = vmatpush1.bf16.msra.mxu0 0
    %675 = vmatprep.subr.bf16.mxu0 0
    %676 = vmatpush1.bf16.msra.mxu0 0
    %677 = vmatprep.mubr.bf16.mxu0 0
    %678 = vmatmul.mubr.bf16.gmra.mrb[0].mxu0 %v596
    %v679 = vpop.f32.mrb[0].mxu0
    %v680 = vadd.f32 0.0, %v679
    %v681 = vpop.f32.mrb[0].mxu0
    %v682 = vpop.f32.mrb[0].mxu0
    %v683 = vadd.f32 0.0, %v682
    %v684 = vpop.f32.mrb[0].mxu0
    %685 = vdwg.mxu0
    %v702 = vunpack.c.l.b16 %v497
    %v703 = vunpack.c.l.b16 %v498
    %v704 = vunpack.c.l.b16 %v499
    %v705 = vunpack.c.l.b16 %v500
    %v706 = vunpack.c.l.b16 %v501
    %v707 = vunpack.c.l.b16 %v502
    %v708 = vunpack.c.l.b16 %v503
    %v709 = vunpack.c.l.b16 %v504
    %v710 = vunpack.c.l.b16 %v505
    %v711 = vunpack.c.l.b16 %v506
    %v712 = vunpack.c.l.b16 %v507
    %v713 = vunpack.c.l.b16 %v508
    %v714 = vunpack.c.l.b16 %v509
    %v715 = vunpack.c.l.b16 %v510
    %v716 = vunpack.c.l.b16 %v511
    %v717 = vunpack.c.l.b16 %v512
    %v718 = vpack.c.b16 %v703, %v702
    %v719 = vpack.c.b16 %v705, %v704
    %v720 = vpack.c.b16 %v707, %v706
    %v721 = vpack.c.b16 %v709, %v708
    %v722 = vpack.c.b16 %v711, %v710
    %v723 = vpack.c.b16 %v713, %v712
    %v724 = vpack.c.b16 %v715, %v714
    %v725 = vpack.c.b16 %v717, %v716
    %734 = vmatprep.subr.bf16.mxu0 0
    %735 = vmatpush1.bf16.msra.mxu0 %v718
    %736 = vmatprep.subr.bf16.mxu0 0
    %737 = vmatpush1.bf16.msra.mxu0 %v719
    %738 = vmatprep.subr.bf16.mxu0 0
    %739 = vmatpush1.bf16.msra.mxu0 %v720
    %740 = vmatprep.subr.bf16.mxu0 0
    %741 = vmatpush1.bf16.msra.mxu0 %v721
    %742 = vmatprep.subr.bf16.mxu0 0
    %743 = vmatpush1.bf16.msra.mxu0 %v722
    %744 = vmatprep.subr.bf16.mxu0 0
    %745 = vmatpush1.bf16.msra.mxu0 %v723
    %746 = vmatprep.subr.bf16.mxu0 0
    %747 = vmatpush1.bf16.msra.mxu0 %v724
    %748 = vmatprep.subr.bf16.mxu0 0
    %749 = vmatpush1.bf16.msra.mxu0 %v725
    %750 = vmatprep.subr.bf16.mxu0 0
    %751 = vmatpush1.bf16.msra.mxu0 0
    %752 = vmatprep.subr.bf16.mxu0 0
    %753 = vmatpush1.bf16.msra.mxu0 0
    %754 = vmatprep.subr.bf16.mxu0 0
    %755 = vmatpush1.bf16.msra.mxu0 0
    %756 = vmatprep.subr.bf16.mxu0 0
    %757 = vmatpush1.bf16.msra.mxu0 0
    %758 = vmatprep.subr.bf16.mxu0 0
    %759 = vmatpush1.bf16.msra.mxu0 0
    %760 = vmatprep.subr.bf16.mxu0 0
    %761 = vmatpush1.bf16.msra.mxu0 0
    %762 = vmatprep.subr.bf16.mxu0 0
    %763 = vmatpush1.bf16.msra.mxu0 0
    %764 = vmatprep.subr.bf16.mxu0 0
    %765 = vmatpush1.bf16.msra.mxu0 0
    %766 = vmatprep.mubr.bf16.mxu0 0
    %767 = vmatmul.mubr.bf16.gmra.mrb[0].mxu0 %v495
    %v768 = vpop.f32.mrb[0].mxu0
    %v769 = vadd.f32 %v680, %v768
    %v770 = vpop.f32.mrb[0].mxu0
    %v771 = vpop.f32.mrb[0].mxu0
    %v772 = vadd.f32 %v683, %v771
    %v773 = vpop.f32.mrb[0].mxu0
    %774 = vdwg.mxu0
    %v776 = vlaneseq
    %v777 = vshrl.u32 %v776, 7
    %v778 = vsub.s32 0, %v777
    %v779 = vrot.slane %v529, %v778
    %v781 = vadd.f32 %v769, %v779
    %v782 = vadd.f32 %v772, %v779
    %783 = vst [vmem:[#allocation13] sm:$0xff] %v781
    %784 = vst [vmem:[#allocation13 + $0x8] sm:$0xff] %v782
    // Predicated region
    $region70: #{tpu_custom_call.1} parent=1 // pred_check
      _
    $region71: #{tpu_custom_call.1} parent=1 // pred_check_branch
      %786 = sbr.rel (0) target = $region73
    $region72: #{tpu_custom_call.1} parent=1 // pred_region
      %s788 = ssub.s32 256, 256
      %789 = vsyncadd [#allocation4], %s788
      %s790 = sshll.u32 [#allocation13], 4
      %s791 = int_to_ptr.vmem [resolvable:$true] %s790
      %796 = dma.vmem_to_hbm [thread:$0]  %s791, 256, %s11, [#allocation4], 128, 128, 8
    $region73: #{tpu_custom_call.1} parent=1 // pred_fallthru
      _
    // Predicated region
    $region74: #{tpu_custom_call.1} parent=1 // pred_check
      _
    $region75: #{tpu_custom_call.1} parent=1 // pred_check_branch
      %798 = sbr.rel (0) target = $region77
    $region76: #{tpu_custom_call.1} parent=1 // pred_region
      %799 = dma.done [#allocation4], 256
    $region77: #{tpu_custom_call.1} parent=1 // pred_fallthru
      _
    %800 = vsyncpa [#allocation3], 1
    %801 = vsyncpa [#allocation6], 1
    %802 = vsyncpa [#allocation9], 1
    %803 = vsyncpa [#allocation12], 1
    %804 = vsyncpa [#allocation4], 1

</llo_original>
